<compile_context>
chip_gen: v5e
topology: v5e:2x2
jax: 0.10.0
libtpu: 0.0.40
codegen_flags: <defaults>
</compile_context>

<pallas_src>
import jax
import jax.numpy as jnp
from jax.experimental import pallas as pl
from jax.experimental.pallas import tpu as pltpu

_LANE_CANDIDATES = (8192, 4096, 2048, 1024, 512, 256, 128)
_TARGET_BLOCK_BYTES = 2 * 1024 * 1024  # ~2 MiB per input block


def _mish_kernel(x_ref, o_ref):
    x = x_ref[...].astype(jnp.float32)
    # tanh(softplus(x)) == u / (u + 2), with u = t*(t+2), t = exp(x)
    # (exact algebraic identity). Clamp x at 20 so u stays finite in f32;
    # for x >= 20 the ratio is 1.0 to f32 precision, so mish(x) == x,
    # matching the reference formulation.
    t = jnp.exp(jnp.minimum(x, 20.0))
    u = t * (t + 2.0)
    o_ref[...] = (x * (u / (u + 2.0))).astype(o_ref.dtype)


def _mish_2d(x2d, tile_rows):
    rows, width = x2d.shape
    return pl.pallas_call(
        _mish_kernel,
        out_shape=jax.ShapeDtypeStruct((rows, width), x2d.dtype),
        grid=(pl.cdiv(rows, tile_rows),),
        in_specs=[pl.BlockSpec((tile_rows, width), lambda i: (i, 0))],
        out_specs=pl.BlockSpec((tile_rows, width), lambda i: (i, 0)),
        compiler_params=pltpu.CompilerParams(
            dimension_semantics=("parallel",),
        ),
    )(x2d)


def mish(x):
    """Elementwise mish on an arbitrary-shaped array via a tiled Pallas kernel."""
    orig_shape = x.shape
    orig_dtype = x.dtype

    flat = x.reshape(-1)
    n = flat.shape[0]
    if n == 0:
        return x

    itemsize = jnp.dtype(orig_dtype).itemsize
    # Sublane packing: f32 -> 8 rows/vreg, bf16 -> 16, int8/fp8 -> 32.
    sub = max(8, 32 // itemsize)

    # Only pad when the element count is not a multiple of 128 (rare for NN
    # activation shapes); mish(0) == 0 so zero padding is value-safe.
    n_pad = (-n) % 128
    if n_pad:
        flat = jnp.pad(flat, (0, n_pad))
    n_tot = n + n_pad

    # Pick the widest lane-dense slab width that divides the element count,
    # preferring widths that still leave >= `sub` rows (full vregs).
    divisors = [w for w in _LANE_CANDIDATES if n_tot % w == 0]
    wide = [w for w in divisors if n_tot // w >= sub]
    width = wide[0] if wide else divisors[0]
    rows = n_tot // width

    # ~2 MiB per block, rounded down to the sublane packing granule. Partial
    # edge blocks (rows % tile_rows != 0) are masked by Pallas automatically.
    target_rows = max(sub, (_TARGET_BLOCK_BYTES // (width * itemsize)) // sub * sub)
    tile_rows = rows if rows <= target_rows else target_rows

    out2d = _mish_2d(flat.reshape(rows, width), tile_rows)

    out_flat = out2d.reshape(-1)
    if n_pad:
        out_flat = out_flat[:n]
    return out_flat.reshape(orig_shape)


if __name__ == "__main__":
    key = jax.random.PRNGKey(0)
    k0, k1 = jax.random.split(key)

    def _ref(v):
        sp = jnp.maximum(v, 0.0) + jnp.log1p(jnp.exp(-jnp.abs(v)))
        return v * jnp.tanh(sp)

    # Small NCHW input consistent with how mish is used between conv layers.
    x = jax.random.normal(k0, (2, 4, 16, 16), dtype=jnp.float32) * 3.0
    y = jax.block_until_ready(mish(x))
    assert y.shape == x.shape and y.dtype == x.dtype
    assert jnp.allclose(y, _ref(x), atol=1e-5, rtol=1e-5)

    # Ragged size to exercise the (rare) zero-pad fallback path.
    x2 = jax.random.normal(k1, (3, 5, 7), dtype=jnp.float32) * 3.0
    y2 = jax.block_until_ready(mish(x2))
    assert y2.shape == x2.shape and y2.dtype == x2.dtype
    assert jnp.allclose(y2, _ref(x2), atol=1e-5, rtol=1e-5)

    print("KERNEL_OK")
</pallas_src>

<mosaic_0001>
module attributes {stable_mosaic.version = 11 : i64} {
  func.func @_mish_kernel(%arg0: i32, %arg1: memref<8x256xf32, #tpu.memory_space<vmem>>, %arg2: memref<8x256xf32, #tpu.memory_space<vmem>>) attributes {dimension_semantics = [#tpu.dimension_semantics<parallel>], iteration_bounds = array<i64: 1>, scalar_prefetch = 0 : i64, scratch_operands = 0 : i64, tpu.core_type = #tpu.core_type<tc>, window_params = [{transform_indices = @transform_0, window_bounds = array<i64: 8, 256>}, {transform_indices = @transform_1, window_bounds = array<i64: 8, 256>}]} {
    %c0 = arith.constant 0 : index
    %c0_0 = arith.constant 0 : index
    %0 = vector.load %arg1[%c0, %c0_0] : memref<8x256xf32, #tpu.memory_space<vmem>>, vector<8x256xf32>
    %cst = arith.constant 2.000000e+01 : f32
    %1 = vector.broadcast %cst : f32 to vector<8x256xf32>
    %2 = arith.minimumf %0, %1 : vector<8x256xf32>
    %3 = math.exp %2 : vector<8x256xf32>
    %cst_1 = arith.constant 2.000000e+00 : f32
    %4 = vector.broadcast %cst_1 : f32 to vector<8x256xf32>
    %5 = arith.addf %3, %4 : vector<8x256xf32>
    %6 = arith.mulf %3, %5 : vector<8x256xf32>
    %cst_2 = arith.constant 2.000000e+00 : f32
    %7 = vector.broadcast %cst_2 : f32 to vector<8x256xf32>
    %8 = arith.addf %6, %7 : vector<8x256xf32>
    %9 = arith.divf %6, %8 : vector<8x256xf32>
    %10 = arith.mulf %0, %9 : vector<8x256xf32>
    %c0_3 = arith.constant 0 : index
    %c0_4 = arith.constant 0 : index
    %11 = vector.load %arg2[%c0_3, %c0_4] : memref<8x256xf32, #tpu.memory_space<vmem>>, vector<8x256xf32>
    tpu.vector_store %arg2[%c0_3, %c0_4], %10 {strides = array<i32>} : memref<8x256xf32, #tpu.memory_space<vmem>>, vector<8x256xf32>,
    return
  }
  func.func @transform_0(%arg0: i32) -> (i32, i32) {
    %c0_i32 = arith.constant 0 : i32
    %c0_i32_0 = arith.constant 0 : i32
    return %arg0, %c0_i32 : i32, i32
  }
  func.func @transform_1(%arg0: i32) -> (i32, i32) {
    %c0_i32 = arith.constant 0 : i32
    %c0_i32_0 = arith.constant 0 : i32
    return %arg0, %c0_i32 : i32, i32
  }
}

</mosaic_0001>

<llo_original>
// kernel: tpu_custom_call.1
$region0: #{tpu_custom_call.1}
  #allocation0 [shape = 'u32[]', space=smem, size = 0x4, offset = 0x4, fixed_abs, tag = 'smem constant byte address 0x4 - core index']
  #allocation1 [shape = 'u32[72,128]{1,0:T(1,128)}', space=vmem, size = 0x9000, scoped, tag = 'internal scratch']
  %s0 = inlined_call_operand.hbm [shape: f32[8,256], index: 0, kind: input, shape index: {}]
  %s1 = inlined_call_operand.hbm [shape: f32[8,256], index: 1, kind: output, shape index: {}]
  %s2 = sld [smem:[#allocation0]]
  $region18: #{tpu_custom_call.1} parent=0
    _
  %s4 = ssub.s32 1, %s2
  %s5 = scalar_select 0, %s4, %s2
  $region1: #{tpu_custom_call.1} parent=0
    #allocation2 [shape = 'u8[8192]{0}', space=vmem, size = 0x2000, scoped, tag = 'input window, operand 0, single buffered']
    #allocation3 [shape = 's32[1]{0}', space=sflag, size = 0x4, scoped, tag = 'scoped memory for tpu_custom_call.1']
    #allocation4 [shape = 's32[1]{0}', space=sflag, size = 0x4, scoped, tag = 'scoped memory for tpu_custom_call.1']
    #allocation5 [shape = 'u8[8192]{0}', space=vmem, size = 0x2000, scoped, tag = 'output window, operand 0, single buffered']
    %6 = vsyncpa [#allocation3], 0
    %7 = vsyncpa [#allocation4], 0
    // Predicated region
    $region2: #{tpu_custom_call.1} parent=1 // pred_check
      _
    $region3: #{tpu_custom_call.1} parent=1 // pred_check_branch
      %9 = sbr.rel (0) target = $region5
    $region4: #{tpu_custom_call.1} parent=1 // pred_region
      %11 = vsyncadd [#allocation3], 0
      %s13 = sshll.u32 %s0, 4
      %s14 = int_to_ptr.hbm [resolvable:$true] %s13
      %s15 = sshll.u32 [#allocation2], 4
      %s16 = int_to_ptr.vmem [resolvable:$true] %s15
      %18 = dma.hbm_to_vmem [thread:$0]  %s14, 256, %s16, [#allocation3]
    $region5: #{tpu_custom_call.1} parent=1 // pred_fallthru
      _
    // Predicated region
    $region6: #{tpu_custom_call.1} parent=1 // pred_check
      _
    $region7: #{tpu_custom_call.1} parent=1 // pred_check_branch
      %20 = sbr.rel (0) target = $region9
    $region8: #{tpu_custom_call.1} parent=1 // pred_region
      %22 = dma.done [#allocation3], 256
    $region9: #{tpu_custom_call.1} parent=1 // pred_fallthru
      _
    %v23 = vld [vmem:[#allocation2] sm:$0xff]
    %v24 = vld [vmem:[#allocation2 + $0x8] sm:$0xff]
    %v25 = vmin.f32 %v23, 20.0
    %v26 = vmin.f32 %v24, 20.0
    %v27 = vmul.f32 %v25, 1.442695
    %v28 = vpow.pop %v27
    %v29 = vmul.f32 %v26, 1.442695
    %v30 = vpow.pop %v29
    %v31 = vadd.f32 %v28, 2.0
    %v32 = vadd.f32 %v30, 2.0
    %v33 = vmul.f32 %v28, %v31
    %v34 = vmul.f32 %v30, %v32
    %v35 = vadd.f32 %v33, 2.0
    %v36 = vadd.f32 %v34, 2.0
    %v37 = vrcp.pop %v35
    %v38 = vmul.f32 %v35, %v37
    %v39 = vsub.f32 1.0, %v38
    %v40 = vmul.f32 %v37, %v39
    %v41 = vadd.f32 %v37, %v40
    %vm42 = vweird.f32 %v35
    %vm43 = vweird.f32 %v37
    %vm44 = vmor %vm42, %vm43
    %v45 = vsel %vm44, %v37, %v41
    %v46 = vand.u32 2147483647, %v35
    %vm47 = vcmp.eq.f32.partialorder %v46, 8.507059e+37
    %v48 = vand.u32 %v35, 2147483648
    %v49 = vor.u32 1.1754944e-38, %v48
    %v50 = vsel %vm47, %v49, %v45
    %v51 = vmul.f32 %v33, %v50
    %v52 = vrcp.pop %v36
    %v53 = vmul.f32 %v36, %v52
    %v54 = vsub.f32 1.0, %v53
    %v55 = vmul.f32 %v52, %v54
    %v56 = vadd.f32 %v52, %v55
    %vm57 = vweird.f32 %v36
    %vm58 = vweird.f32 %v52
    %vm59 = vmor %vm57, %vm58
    %v60 = vsel %vm59, %v52, %v56
    %v61 = vand.u32 2147483647, %v36
    %vm62 = vcmp.eq.f32.partialorder %v61, 8.507059e+37
    %v63 = vand.u32 %v36, 2147483648
    %v64 = vor.u32 1.1754944e-38, %v63
    %v65 = vsel %vm62, %v64, %v60
    %v66 = vmul.f32 %v34, %v65
    %v67 = vmul.f32 %v23, %v51
    %v68 = vmul.f32 %v24, %v66
    %69 = vst [vmem:[#allocation5] sm:$0xff] %v67
    %70 = vst [vmem:[#allocation5 + $0x8] sm:$0xff] %v68
    // Predicated region
    $region10: #{tpu_custom_call.1} parent=1 // pred_check
      _
    $region11: #{tpu_custom_call.1} parent=1 // pred_check_branch
      %72 = sbr.rel (0) target = $region13
    $region12: #{tpu_custom_call.1} parent=1 // pred_region
      %74 = vsyncadd [#allocation4], 0
      %s76 = sshll.u32 [#allocation5], 4
      %s77 = int_to_ptr.vmem [resolvable:$true] %s76
      %s78 = sshll.u32 %s1, 4
      %s79 = int_to_ptr.hbm [resolvable:$true] %s78
      %81 = dma.vmem_to_hbm [thread:$0]  %s77, 256, %s79, [#allocation4]
    $region13: #{tpu_custom_call.1} parent=1 // pred_fallthru
      _
    // Predicated region
    $region14: #{tpu_custom_call.1} parent=1 // pred_check
      _
    $region15: #{tpu_custom_call.1} parent=1 // pred_check_branch
      %83 = sbr.rel (0) target = $region17
    $region16: #{tpu_custom_call.1} parent=1 // pred_region
      %85 = dma.done [#allocation4], 256
    $region17: #{tpu_custom_call.1} parent=1 // pred_fallthru
      _
    %86 = vsyncpa [#allocation3], 1
    %87 = vsyncpa [#allocation4], 1

</llo_original>
